<compile_context>
chip_gen: v7x
topology: tpu7x:2x2x1
jax: 0.10.0
libtpu: 0.0.40
codegen_flags: <defaults>
</compile_context>

<pallas_src>
import jax
import jax.numpy as jnp
from jax import lax
from jax.experimental import pallas as pl
from jax.experimental.pallas import tpu as pltpu


# ----------------------------- feature config ------------------------------
# Synthetic config mirroring SparseFeat / VarLenSparseFeat columns:
#   user: SparseFeat('user_id', vocab=50, dim=8)
#         VarLenSparseFeat('hist_movie', maxlen=4, dim=8, shares 'movie_id')
#   item: SparseFeat('movie_id', vocab=60, dim=8)
#         SparseFeat('cate',     vocab=20, dim=8)
EMB_DIM = 8
MAXLEN = 4
VOCAB = {"user_id": 50, "movie_id": 60, "cate": 20}
USER_DNN_IN = EMB_DIM + MAXLEN * EMB_DIM          # 40
ITEM_DNN_IN = 2 * EMB_DIM                         # 16
HIDDEN = (64, 32)

# NOTE: the torch module inits embeddings with std=0.01, which makes every
# logit ~1e-4 and every sigmoid ~0.5 (a non-discriminative numerical check).
# Forward semantics do not depend on the init scale, so the self-test uses a
# larger std to make the kernel-vs-f32-reference comparison meaningful.
EMB_STD = 0.5


def _round_up(x, m):
    return (x + m - 1) // m * m


# ----------------------------- Pallas kernel -------------------------------
def dssm_kernel(idx_ref, tbl_ref, w2_ref, b2_ref, out_ref):
    tb = idx_ref.shape[0]          # rows per tile
    n_slots = idx_ref.shape[1]     # 7 feature slots + 1 always-on bias slot
    v_pad = tbl_ref.shape[0]       # padded fold-table rows (multiple of 128)
    half = w2_ref.shape[1] // 2    # per-tower output width (32)

    # ---- fused embedding gather + first Linear (+bias) as a multi-hot matmul
    cols = idx_ref[...]                                            # (TB, 8) int32, offsets pre-added
    lane = lax.broadcasted_iota(jnp.int32, (tb, v_pad), 1)
    hot = (lane == cols[:, 0:1]).astype(jnp.float32)
    for s in range(1, n_slots):
        hot = hot + (lane == cols[:, s:s + 1]).astype(jnp.float32)
    hot = hot.astype(jnp.bfloat16)                                 # exact 0/1 in bf16
    h = jnp.dot(hot, tbl_ref[...], preferred_element_type=jnp.float32)   # (TB, 128)
    h = jnp.maximum(h, 0.0).astype(jnp.bfloat16)                   # ReLU (Dropout p=0 == identity)

    # ---- fused second Linear for both towers (block-diagonal weights) ------
    h2 = jnp.dot(h, w2_ref[...], preferred_element_type=jnp.float32) + b2_ref[...]  # (TB, 64)
    uo = h2[:, :half]                                              # user tower output (TB, 32)
    io = h2[:, half:]                                              # item tower output (TB, 32)

    # ---- sigmoid((user * item).sum(dim=1)), exp + reciprocal on the EUP ----
    logit = jnp.sum(uo * io, axis=1, keepdims=True)                # (TB, 1)
    # (TB, 1) output -> masked 1-lane stores; writeback is tiny, accepted.
    out_ref[...] = pl.reciprocal(1.0 + jnp.exp(-logit), approx=True)


def dssm_pallas(idx_all, packed, *, tile_b=512):
    """idx_all: (B, 8) int32 offset-adjusted slot ids (last column = bias slot)."""
    B, n_slots = idx_all.shape
    TB = min(tile_b, _round_up(B, 8))
    Bp = _round_up(B, TB)
    if Bp != B:
        # Padded rows carry id 0 everywhere (valid lookups); sliced off below.
        idx_all = jnp.pad(idx_all, ((0, Bp - B), (0, 0)))

    tbl, w2, b2 = packed["tbl"], packed["w2"], packed["b2"]

    out = pl.pallas_call(
        dssm_kernel,
        out_shape=jax.ShapeDtypeStruct((Bp, 1), jnp.float32),
        grid=(Bp // TB,),
        in_specs=[
            pl.BlockSpec((TB, n_slots), lambda i: (i, 0)),   # streamed per-row ids
            pl.BlockSpec(tbl.shape, lambda i: (0, 0)),       # fold table, VMEM-resident
            pl.BlockSpec(w2.shape, lambda i: (0, 0)),        # block-diag L2 weights, resident
            pl.BlockSpec(b2.shape, lambda i: (0, 0)),        # fused L2 bias, resident
        ],
        out_specs=pl.BlockSpec((TB, 1), lambda i: (i, 0)),
        compiler_params=pltpu.CompilerParams(
            dimension_semantics=("parallel",),               # shard batch tiles across TCs (v7x)
        ),
    )(idx_all, tbl, w2, b2)
    return out[:B, 0]   # matches torch output shape (B,)


# ------------------------- parameter construction --------------------------
def init_params(key):
    keys = jax.random.split(key, 11)
    params = {}
    params["emb_user_id"] = EMB_STD * jax.random.normal(keys[0], (VOCAB["user_id"], EMB_DIM), jnp.float32)
    params["emb_movie_id"] = EMB_STD * jax.random.normal(keys[1], (VOCAB["movie_id"], EMB_DIM), jnp.float32)
    params["emb_cate"] = EMB_STD * jax.random.normal(keys[2], (VOCAB["cate"], EMB_DIM), jnp.float32)

    def linear(kw, kb, fan_in, fan_out):
        bound = 1.0 / jnp.sqrt(fan_in)         # PyTorch nn.Linear default init
        w = jax.random.uniform(kw, (fan_in, fan_out), jnp.float32, -bound, bound)
        b = jax.random.uniform(kb, (1, fan_out), jnp.float32, -bound, bound)
        return w, b

    params["w1u"], params["b1u"] = linear(keys[3], keys[4], USER_DNN_IN, HIDDEN[0])
    params["w2u"], params["b2u"] = linear(keys[5], keys[6], HIDDEN[0], HIDDEN[1])
    params["w1i"], params["b1i"] = linear(keys[7], keys[8], ITEM_DNN_IN, HIDDEN[0])
    params["w2i"], params["b2i"] = linear(keys[9], keys[10], HIDDEN[0], HIDDEN[1])
    return params


def pack_params(p):
    """Host-side (one-time) packing of raw params into the fused kernel operands."""
    E_u, E_m, E_c = p["emb_user_id"], p["emb_movie_id"], p["emb_cate"]
    W1u, b1u, W1i, b1i = p["w1u"], p["b1u"], p["w1i"], p["b1i"]
    W2u, b2u, W2i, b2i = p["w2u"], p["b2u"], p["w2i"], p["b2i"]
    H1 = W1u.shape[1]                                   # 64 per tower -> 128 fused hidden

    # Feature slots in the module's concat order: user_id, hist[0..3], movie_id, cate.
    slots = [(E_u, W1u[0:EMB_DIM, :], 0)]
    for k in range(MAXLEN):
        slots.append((E_m, W1u[(1 + k) * EMB_DIM:(2 + k) * EMB_DIM, :], 0))
    slots.append((E_m, W1i[0:EMB_DIM, :], 1))
    slots.append((E_c, W1i[EMB_DIM:2 * EMB_DIM, :], 1))

    rows, offsets, off = [], [], 0
    for E, w_slice, tower in slots:
        t = E @ w_slice                                 # (vocab, 64): embedding folded into L1
        z = jnp.zeros_like(t)
        rows.append(jnp.concatenate([t, z] if tower == 0 else [z, t], axis=1))  # -> (vocab, 128)
        offsets.append(off)
        off += E.shape[0]
    bias_idx = off                                      # always-on slot selects the L1 bias row
    rows.append(jnp.concatenate([b1u, b1i], axis=1))    # (1, 128)
    tbl = jnp.concatenate(rows, axis=0)                 # (371, 128)
    v_pad = _round_up(tbl.shape[0], 128)                # align K to 128 lanes -> (384, 128)
    tbl = jnp.pad(tbl, ((0, v_pad - tbl.shape[0]), (0, 0)))

    H2 = W2u.shape[1]                                   # 32 per tower -> 64 fused
    w2 = jnp.zeros((2 * H1, 2 * H2), jnp.float32)
    w2 = w2.at[:H1, :H2].set(W2u).at[H1:, H2:].set(W2i)   # block-diagonal second layer
    b2 = jnp.concatenate([b2u, b2i], axis=1)            # (1, 64)

    return {
        "tbl": tbl.astype(jnp.bfloat16),
        "w2": w2.astype(jnp.bfloat16),
        "b2": b2.astype(jnp.float32),
        "offsets": jnp.asarray(offsets, jnp.int32),     # (7,)
        "bias_idx": int(bias_idx),                      # 370
    }


def pack_indices(user_id_idx, hist_movie_idx, movie_id_idx, cate_idx, packed):
    """(B,) + (B,MAXLEN) + (B,) + (B,) raw ids -> (B, 8) offset-adjusted slot ids."""
    cols = [user_id_idx] + [hist_movie_idx[:, k] for k in range(hist_movie_idx.shape[1])] \
           + [movie_id_idx, cate_idx]
    cols = jnp.stack(cols, axis=1).astype(jnp.int32) + packed["offsets"][None, :]
    bias_col = jnp.full((cols.shape[0], 1), packed["bias_idx"], jnp.int32)
    return jnp.concatenate([cols, bias_col], axis=1)    # (B, 8)


# ------------------------------ reference (JAX, f32, raw params) -----------
def dssm_reference(p, user_id_idx, hist_movie_idx, movie_id_idx, cate_idx):
    B = user_id_idx.shape[0]
    ue = jnp.concatenate([p["emb_user_id"][user_id_idx],
                          p["emb_movie_id"][hist_movie_idx].reshape(B, -1)], axis=1)   # (B, 40)
    ie = jnp.concatenate([p["emb_movie_id"][movie_id_idx],
                          p["emb_cate"][cate_idx]], axis=1)                            # (B, 16)
    hu = jnp.maximum(ue @ p["w1u"] + p["b1u"], 0.0)
    uo = hu @ p["w2u"] + p["b2u"]
    hi = jnp.maximum(ie @ p["w1i"] + p["b1i"], 0.0)
    io = hi @ p["w2i"] + p["b2i"]
    return jax.nn.sigmoid(jnp.sum(uo * io, axis=1))


if __name__ == "__main__":
    key = jax.random.PRNGKey(0)
    pkey, dkey = jax.random.split(key)
    params = init_params(pkey)
    packed = pack_params(params)

    def make_inputs(k, B):
        k1, k2, k3, k4 = jax.random.split(k, 4)
        uid = jax.random.randint(k1, (B,), 0, VOCAB["user_id"])
        hist = jax.random.randint(k2, (B, MAXLEN), 0, VOCAB["movie_id"])
        mid = jax.random.randint(k3, (B,), 0, VOCAB["movie_id"])
        cid = jax.random.randint(k4, (B,), 0, VOCAB["cate"])
        return uid, hist, mid, cid

    # B=2: small sanity case (single tile).  B=2000: exercises the multi-tile
    # grid plus last-tile padding (TB=512 -> grid of 4 with a padded tail).
    for B in (2, 2000):
        uid, hist, mid, cid = make_inputs(jax.random.fold_in(dkey, B), B)
        idx_all = pack_indices(uid, hist, mid, cid, packed)           # (B, 8) int32
        out = dssm_pallas(idx_all, packed)
        out = jax.block_until_ready(out)

        ref = dssm_reference(params, uid, hist, mid, cid)
        assert out.shape == (B,)
        assert jnp.allclose(out, ref, atol=5e-3, rtol=0.0), (
            B, float(jnp.max(jnp.abs(out - ref))))

    print("KERNEL_OK")
</pallas_src>

<mosaic_0001>
module attributes {stable_mosaic.version = 11 : i64} {
  func.func @dssm_kernel(%arg0: i32, %arg1: memref<8x8xi32, #tpu.memory_space<vmem>>, %arg2: memref<384x128xbf16, #tpu.memory_space<vmem>>, %arg3: memref<128x64xbf16, #tpu.memory_space<vmem>>, %arg4: memref<1x64xf32, #tpu.memory_space<vmem>>, %arg5: memref<8x1xf32, #tpu.memory_space<vmem>>) attributes {dimension_semantics = [#tpu.dimension_semantics<parallel>], iteration_bounds = array<i64: 1>, scalar_prefetch = 0 : i64, scratch_operands = 0 : i64, tpu.core_type = #tpu.core_type<tc>, window_params = [{transform_indices = @transform_0, window_bounds = array<i64: 8, 8>}, {pipeline_mode = #tpu.pipeline_mode<synchronous>, transform_indices = @transform_1, window_bounds = array<i64: 384, 128>}, {pipeline_mode = #tpu.pipeline_mode<synchronous>, transform_indices = @transform_2, window_bounds = array<i64: 128, 64>}, {pipeline_mode = #tpu.pipeline_mode<synchronous>, transform_indices = @transform_3, window_bounds = array<i64: 1, 64>}, {transform_indices = @transform_4, window_bounds = array<i64: 8, 1>}]} {
    %c0 = arith.constant 0 : index
    %c0_0 = arith.constant 0 : index
    %0 = vector.load %arg1[%c0, %c0_0] : memref<8x8xi32, #tpu.memory_space<vmem>>, vector<8x8xi32>
    %1 = tpu.iota {dimensions = array<i32: 1>} : vector<8x384xi32>
    %2 = vector.extract_strided_slice %0 {offsets = [0, 0], sizes = [8, 1], strides = [1, 1]} : vector<8x8xi32> to vector<8x1xi32>
    %3 = vector.broadcast %2 : vector<8x1xi32> to vector<8x384xi32>
    %4 = arith.cmpi eq, %1, %3 : vector<8x384xi32>
    %5 = arith.extui %4 : vector<8x384xi1> to vector<8x384xi32>
    %6 = arith.sitofp %5 : vector<8x384xi32> to vector<8x384xf32>
    %7 = vector.extract_strided_slice %0 {offsets = [0, 1], sizes = [8, 1], strides = [1, 1]} : vector<8x8xi32> to vector<8x1xi32>
    %8 = vector.broadcast %7 : vector<8x1xi32> to vector<8x384xi32>
    %9 = arith.cmpi eq, %1, %8 : vector<8x384xi32>
    %10 = arith.extui %9 : vector<8x384xi1> to vector<8x384xi32>
    %11 = arith.sitofp %10 : vector<8x384xi32> to vector<8x384xf32>
    %12 = arith.addf %6, %11 : vector<8x384xf32>
    %13 = vector.extract_strided_slice %0 {offsets = [0, 2], sizes = [8, 1], strides = [1, 1]} : vector<8x8xi32> to vector<8x1xi32>
    %14 = vector.broadcast %13 : vector<8x1xi32> to vector<8x384xi32>
    %15 = arith.cmpi eq, %1, %14 : vector<8x384xi32>
    %16 = arith.extui %15 : vector<8x384xi1> to vector<8x384xi32>
    %17 = arith.sitofp %16 : vector<8x384xi32> to vector<8x384xf32>
    %18 = arith.addf %12, %17 : vector<8x384xf32>
    %19 = vector.extract_strided_slice %0 {offsets = [0, 3], sizes = [8, 1], strides = [1, 1]} : vector<8x8xi32> to vector<8x1xi32>
    %20 = vector.broadcast %19 : vector<8x1xi32> to vector<8x384xi32>
    %21 = arith.cmpi eq, %1, %20 : vector<8x384xi32>
    %22 = arith.extui %21 : vector<8x384xi1> to vector<8x384xi32>
    %23 = arith.sitofp %22 : vector<8x384xi32> to vector<8x384xf32>
    %24 = arith.addf %18, %23 : vector<8x384xf32>
    %25 = vector.extract_strided_slice %0 {offsets = [0, 4], sizes = [8, 1], strides = [1, 1]} : vector<8x8xi32> to vector<8x1xi32>
    %26 = vector.broadcast %25 : vector<8x1xi32> to vector<8x384xi32>
    %27 = arith.cmpi eq, %1, %26 : vector<8x384xi32>
    %28 = arith.extui %27 : vector<8x384xi1> to vector<8x384xi32>
    %29 = arith.sitofp %28 : vector<8x384xi32> to vector<8x384xf32>
    %30 = arith.addf %24, %29 : vector<8x384xf32>
    %31 = vector.extract_strided_slice %0 {offsets = [0, 5], sizes = [8, 1], strides = [1, 1]} : vector<8x8xi32> to vector<8x1xi32>
    %32 = vector.broadcast %31 : vector<8x1xi32> to vector<8x384xi32>
    %33 = arith.cmpi eq, %1, %32 : vector<8x384xi32>
    %34 = arith.extui %33 : vector<8x384xi1> to vector<8x384xi32>
    %35 = arith.sitofp %34 : vector<8x384xi32> to vector<8x384xf32>
    %36 = arith.addf %30, %35 : vector<8x384xf32>
    %37 = vector.extract_strided_slice %0 {offsets = [0, 6], sizes = [8, 1], strides = [1, 1]} : vector<8x8xi32> to vector<8x1xi32>
    %38 = vector.broadcast %37 : vector<8x1xi32> to vector<8x384xi32>
    %39 = arith.cmpi eq, %1, %38 : vector<8x384xi32>
    %40 = arith.extui %39 : vector<8x384xi1> to vector<8x384xi32>
    %41 = arith.sitofp %40 : vector<8x384xi32> to vector<8x384xf32>
    %42 = arith.addf %36, %41 : vector<8x384xf32>
    %43 = vector.extract_strided_slice %0 {offsets = [0, 7], sizes = [8, 1], strides = [1, 1]} : vector<8x8xi32> to vector<8x1xi32>
    %44 = vector.broadcast %43 : vector<8x1xi32> to vector<8x384xi32>
    %45 = arith.cmpi eq, %1, %44 : vector<8x384xi32>
    %46 = arith.extui %45 : vector<8x384xi1> to vector<8x384xi32>
    %47 = arith.sitofp %46 : vector<8x384xi32> to vector<8x384xf32>
    %48 = arith.addf %42, %47 : vector<8x384xf32>
    %49 = arith.truncf %48 : vector<8x384xf32> to vector<8x384xbf16>
    %c0_1 = arith.constant 0 : index
    %c0_2 = arith.constant 0 : index
    %50 = vector.load %arg2[%c0_1, %c0_2] : memref<384x128xbf16, #tpu.memory_space<vmem>>, vector<384x128xbf16>
    %cst = arith.constant dense<0.000000e+00> : vector<8x128xf32>
    %51 = tpu.matmul %49, %50, %cst {dimension_numbers = #tpu.dot_dimension_numbers<[1], [0], [0], [1], [0, 0, 1, 1], [], []>} : vector<8x384xbf16>, vector<384x128xbf16>, vector<8x128xf32> -> vector<8x128xf32>
    %cst_3 = arith.constant 0.000000e+00 : f32
    %52 = vector.broadcast %cst_3 : f32 to vector<8x128xf32>
    %53 = arith.maximumf %51, %52 : vector<8x128xf32>
    %54 = arith.truncf %53 : vector<8x128xf32> to vector<8x128xbf16>
    %c0_4 = arith.constant 0 : index
    %c0_5 = arith.constant 0 : index
    %55 = vector.load %arg3[%c0_4, %c0_5] : memref<128x64xbf16, #tpu.memory_space<vmem>>, vector<128x64xbf16>
    %cst_6 = arith.constant dense<0.000000e+00> : vector<8x64xf32>
    %56 = tpu.matmul %54, %55, %cst_6 {dimension_numbers = #tpu.dot_dimension_numbers<[1], [0], [0], [1], [0, 0, 1, 1], [], []>} : vector<8x128xbf16>, vector<128x64xbf16>, vector<8x64xf32> -> vector<8x64xf32>
    %c0_7 = arith.constant 0 : index
    %c0_8 = arith.constant 0 : index
    %57 = vector.load %arg4[%c0_7, %c0_8] : memref<1x64xf32, #tpu.memory_space<vmem>>, vector<1x64xf32>
    %58 = vector.broadcast %57 : vector<1x64xf32> to vector<8x64xf32>
    %59 = arith.addf %56, %58 : vector<8x64xf32>
    %60 = vector.extract_strided_slice %59 {offsets = [0, 0], sizes = [8, 32], strides = [1, 1]} : vector<8x64xf32> to vector<8x32xf32>
    %61 = vector.extract_strided_slice %59 {offsets = [0, 32], sizes = [8, 32], strides = [1, 1]} : vector<8x64xf32> to vector<8x32xf32>
    %62 = arith.mulf %60, %61 : vector<8x32xf32>
    %cst_9 = arith.constant dense<0.000000e+00> : vector<8xf32>
    %63 = vector.multi_reduction <add>, %62, %cst_9 [1] : vector<8x32xf32> to vector<8xf32>
    %64 = vector.shape_cast %63 : vector<8xf32> to vector<8x1xf32>
    %cst_10 = arith.constant 0.000000e+00 : f32
    %65 = vector.broadcast %cst_10 : f32 to vector<8x1xf32>
    %66 = arith.subf %65, %64 : vector<8x1xf32>
    %67 = math.exp %66 : vector<8x1xf32>
    %cst_11 = arith.constant 1.000000e+00 : f32
    %68 = vector.broadcast %cst_11 : f32 to vector<8x1xf32>
    %69 = arith.addf %68, %67 : vector<8x1xf32>
    %70 = tpu.reciprocal %69 {approx = true} : vector<8x1xf32> -> vector<8x1xf32>
    %c0_12 = arith.constant 0 : index
    %c0_13 = arith.constant 0 : index
    %71 = vector.load %arg5[%c0_12, %c0_13] : memref<8x1xf32, #tpu.memory_space<vmem>>, vector<8x1xf32>
    tpu.vector_store %arg5[%c0_12, %c0_13], %70 {strides = array<i32>} : memref<8x1xf32, #tpu.memory_space<vmem>>, vector<8x1xf32>,
    return
  }
  func.func @transform_0(%arg0: i32) -> (i32, i32) {
    %c0_i32 = arith.constant 0 : i32
    %c0_i32_0 = arith.constant 0 : i32
    return %arg0, %c0_i32 : i32, i32
  }
  func.func @transform_1(%arg0: i32) -> (i32, i32) {
    %c0_i32 = arith.constant 0 : i32
    %c0_i32_0 = arith.constant 0 : i32
    %c0_i32_1 = arith.constant 0 : i32
    return %c0_i32, %c0_i32_0 : i32, i32
  }
  func.func @transform_2(%arg0: i32) -> (i32, i32) {
    %c0_i32 = arith.constant 0 : i32
    %c0_i32_0 = arith.constant 0 : i32
    %c0_i32_1 = arith.constant 0 : i32
    return %c0_i32, %c0_i32_0 : i32, i32
  }
  func.func @transform_3(%arg0: i32) -> (i32, i32) {
    %c0_i32 = arith.constant 0 : i32
    %c0_i32_0 = arith.constant 0 : i32
    %c0_i32_1 = arith.constant 0 : i32
    return %c0_i32, %c0_i32_0 : i32, i32
  }
  func.func @transform_4(%arg0: i32) -> (i32, i32) {
    %c0_i32 = arith.constant 0 : i32
    %c0_i32_0 = arith.constant 0 : i32
    return %arg0, %c0_i32 : i32, i32
  }
}

</mosaic_0001>

<llo_original>
// kernel: tpu_custom_call.1
$region0: #{tpu_custom_call.1}
  #allocation0 [shape = 'u32[]', space=smem, size = 0x4, offset = 0x4, fixed_abs, tag = 'smem constant byte address 0x4 - core index']
  #allocation1 [shape = 'u32[144,128]{1,0:T(1,128)}', space=vmem, size = 0x12000, scoped, tag = 'internal scratch']
  %s0 = inlined_call_operand.vmem [shape: s32[8,8], index: 0, kind: input, shape index: {}]
  %s1 = inlined_call_operand.hbm [shape: bf16[384,128], index: 1, kind: input, shape index: {}]
  %s2 = inlined_call_operand.vmem [shape: bf16[128,64], index: 2, kind: input, shape index: {}]
  %s3 = inlined_call_operand.vmem [shape: f32[1,64], index: 3, kind: input, shape index: {}]
  %s4 = inlined_call_operand.vmem [shape: f32[8,1], index: 4, kind: output, shape index: {}]
  %s5 = sld [smem:[#allocation0]]
  $region30: #{tpu_custom_call.1} parent=0
    _
  %s7 = ssub.s32 1, %s5
  %s8 = scalar_select 0, %s7, %s5
  $region1: #{tpu_custom_call.1} parent=0
    #allocation2 [shape = 'u8[98304]{0}', space=vmem, size = 0x18000, scoped, tag = 'input window, operand 1, single buffered']
    #allocation3 [shape = 's32[1]{0}', space=sflag, size = 0x4, scoped, tag = 'scoped memory for tpu_custom_call.1']
    %9 = vsyncpa [#allocation3], 0
    // Predicated region
    $region2: #{tpu_custom_call.1} parent=1 // pred_check
      _
    $region3: #{tpu_custom_call.1} parent=1 // pred_check_branch
      %11 = sbr.rel (0) target = $region5
    $region4: #{tpu_custom_call.1} parent=1 // pred_region
      _
    $region5: #{tpu_custom_call.1} parent=1 // pred_fallthru
      _
    // Predicated region
    $region6: #{tpu_custom_call.1} parent=1 // pred_check
      _
    $region7: #{tpu_custom_call.1} parent=1 // pred_check_branch
      %13 = sbr.rel (0) target = $region9
    $region8: #{tpu_custom_call.1} parent=1 // pred_region
      %s15 = ssub.s32 3072, 3072
      %16 = vsyncadd [#allocation3], %s15
      %s17 = sshll.u32 [#allocation2], 4
      %s18 = int_to_ptr.vmem [resolvable:$true] %s17
      %23 = dma.hbm_to_vmem [thread:$0]  %s1, 3072, %s18, [#allocation3], 64, 64, 4
    $region9: #{tpu_custom_call.1} parent=1 // pred_fallthru
      _
    // Predicated region
    $region10: #{tpu_custom_call.1} parent=1 // pred_check
      _
    $region11: #{tpu_custom_call.1} parent=1 // pred_check_branch
      %25 = sbr.rel (0) target = $region13
    $region12: #{tpu_custom_call.1} parent=1 // pred_region
      _
    $region13: #{tpu_custom_call.1} parent=1 // pred_fallthru
      _
    // Predicated region
    $region14: #{tpu_custom_call.1} parent=1 // pred_check
      _
    $region15: #{tpu_custom_call.1} parent=1 // pred_check_branch
      %27 = sbr.rel (0) target = $region17
    $region16: #{tpu_custom_call.1} parent=1 // pred_region
      _
    $region17: #{tpu_custom_call.1} parent=1 // pred_fallthru
      _
    // Predicated region
    $region18: #{tpu_custom_call.1} parent=1 // pred_check
      _
    $region19: #{tpu_custom_call.1} parent=1 // pred_check_branch
      %29 = sbr.rel (0) target = $region21
    $region20: #{tpu_custom_call.1} parent=1 // pred_region
      %30 = dma.done [#allocation3], 3072
    $region21: #{tpu_custom_call.1} parent=1 // pred_fallthru
      _
    %v32 = vld [vmem:[%s0] sm:$0xff]
    %v33 = vlaneseq
    %v34 = vand.u32 %v33, 127
    %v35 = vadd.s32 %v34, 128
    %v36 = vadd.s32 %v34, 256
    %37 = vset.pattern.permute.xlu0 0
    %38 = vperm.xlu0 %37, %v32
    %v39 = vpop.permute.xlu0 %38
    %vm40 = vcmp.eq.s32.totalorder %v34, %v39
    %vm41 = vcmp.eq.s32.totalorder %v35, %v39
    %vm42 = vcmp.eq.s32.totalorder %v36, %v39
    %v43 = vsel %vm40, 1, 0
    %v44 = vsel %vm41, 1, 0
    %v45 = vsel %vm42, 1, 0
    %v46 = vcvt.s32.f32 %v43
    %v47 = vcvt.s32.f32 %v44
    %v48 = vcvt.s32.f32 %v45
    %49 = vset.pattern.permute.xlu0 1
    %50 = vperm.xlu0 %49, %v32
    %v51 = vpop.permute.xlu0 %50
    %vm52 = vcmp.eq.s32.totalorder %v34, %v51
    %vm53 = vcmp.eq.s32.totalorder %v35, %v51
    %vm54 = vcmp.eq.s32.totalorder %v36, %v51
    %v55 = vsel %vm52, 1, 0
    %v56 = vsel %vm53, 1, 0
    %v57 = vsel %vm54, 1, 0
    %v58 = vcvt.s32.f32 %v55
    %v59 = vcvt.s32.f32 %v56
    %v60 = vcvt.s32.f32 %v57
    %v61 = vadd.f32 %v46, %v58
    %v62 = vadd.f32 %v47, %v59
    %v63 = vadd.f32 %v48, %v60
    %64 = vset.pattern.permute.xlu0 2
    %65 = vperm.xlu0 %64, %v32
    %v66 = vpop.permute.xlu0 %65
    %vm67 = vcmp.eq.s32.totalorder %v34, %v66
    %vm68 = vcmp.eq.s32.totalorder %v35, %v66
    %vm69 = vcmp.eq.s32.totalorder %v36, %v66
    %v70 = vsel %vm67, 1, 0
    %v71 = vsel %vm68, 1, 0
    %v72 = vsel %vm69, 1, 0
    %v73 = vcvt.s32.f32 %v70
    %v74 = vcvt.s32.f32 %v71
    %v75 = vcvt.s32.f32 %v72
    %v76 = vadd.f32 %v61, %v73
    %v77 = vadd.f32 %v62, %v74
    %v78 = vadd.f32 %v63, %v75
    %79 = vset.pattern.permute.xlu0 3
    %80 = vperm.xlu0 %79, %v32
    %v81 = vpop.permute.xlu0 %80
    %vm82 = vcmp.eq.s32.totalorder %v34, %v81
    %vm83 = vcmp.eq.s32.totalorder %v35, %v81
    %vm84 = vcmp.eq.s32.totalorder %v36, %v81
    %v85 = vsel %vm82, 1, 0
    %v86 = vsel %vm83, 1, 0
    %v87 = vsel %vm84, 1, 0
    %v88 = vcvt.s32.f32 %v85
    %v89 = vcvt.s32.f32 %v86
    %v90 = vcvt.s32.f32 %v87
    %v91 = vadd.f32 %v76, %v88
    %v92 = vadd.f32 %v77, %v89
    %v93 = vadd.f32 %v78, %v90
    %94 = vset.pattern.permute.xlu0 4
    %95 = vperm.xlu0 %94, %v32
    %v96 = vpop.permute.xlu0 %95
    %vm97 = vcmp.eq.s32.totalorder %v34, %v96
    %vm98 = vcmp.eq.s32.totalorder %v35, %v96
    %vm99 = vcmp.eq.s32.totalorder %v36, %v96
    %v100 = vsel %vm97, 1, 0
    %v101 = vsel %vm98, 1, 0
    %v102 = vsel %vm99, 1, 0
    %v103 = vcvt.s32.f32 %v100
    %v104 = vcvt.s32.f32 %v101
    %v105 = vcvt.s32.f32 %v102
    %v106 = vadd.f32 %v91, %v103
    %v107 = vadd.f32 %v92, %v104
    %v108 = vadd.f32 %v93, %v105
    %109 = vset.pattern.permute.xlu0 5
    %110 = vperm.xlu0 %109, %v32
    %v111 = vpop.permute.xlu0 %110
    %vm112 = vcmp.eq.s32.totalorder %v34, %v111
    %vm113 = vcmp.eq.s32.totalorder %v35, %v111
    %vm114 = vcmp.eq.s32.totalorder %v36, %v111
    %v115 = vsel %vm112, 1, 0
    %v116 = vsel %vm113, 1, 0
    %v117 = vsel %vm114, 1, 0
    %v118 = vcvt.s32.f32 %v115
    %v119 = vcvt.s32.f32 %v116
    %v120 = vcvt.s32.f32 %v117
    %v121 = vadd.f32 %v106, %v118
    %v122 = vadd.f32 %v107, %v119
    %v123 = vadd.f32 %v108, %v120
    %124 = vset.pattern.permute.xlu0 6
    %125 = vperm.xlu0 %124, %v32
    %v126 = vpop.permute.xlu0 %125
    %vm127 = vcmp.eq.s32.totalorder %v34, %v126
    %vm128 = vcmp.eq.s32.totalorder %v35, %v126
    %vm129 = vcmp.eq.s32.totalorder %v36, %v126
    %v130 = vsel %vm127, 1, 0
    %v131 = vsel %vm128, 1, 0
    %v132 = vsel %vm129, 1, 0
    %v133 = vcvt.s32.f32 %v130
    %v134 = vcvt.s32.f32 %v131
    %v135 = vcvt.s32.f32 %v132
    %v136 = vadd.f32 %v121, %v133
    %v137 = vadd.f32 %v122, %v134
    %v138 = vadd.f32 %v123, %v135
    %139 = vset.pattern.permute.xlu0 7
    %140 = vperm.xlu0 %139, %v32
    %v141 = vpop.permute.xlu0 %140
    %vm142 = vcmp.eq.s32.totalorder %v34, %v141
    %vm143 = vcmp.eq.s32.totalorder %v35, %v141
    %vm144 = vcmp.eq.s32.totalorder %v36, %v141
    %v145 = vsel %vm142, 1, 0
    %v146 = vsel %vm143, 1, 0
    %v147 = vsel %vm144, 1, 0
    %v148 = vcvt.s32.f32 %v145
    %v149 = vcvt.s32.f32 %v146
    %v150 = vcvt.s32.f32 %v147
    %v151 = vadd.f32 %v136, %v148
    %v152 = vadd.f32 %v137, %v149
    %v153 = vadd.f32 %v138, %v150
    %v154 = vpack.c.bf16 %v151, %v151
    %v155 = vpack.c.bf16 %v152, %v152
    %v156 = vpack.c.bf16 %v153, %v153
    %v157 = vld [vmem:[#allocation2] sm:$0xf]
    %v158 = vld [vmem:[#allocation2 + $0x4] sm:$0xf]
    %v159 = vld [vmem:[#allocation2 + $0x8] sm:$0xf]
    %v160 = vld [vmem:[#allocation2 + $0xc] sm:$0xf]
    %v161 = vld [vmem:[#allocation2 + $0x10] sm:$0xf]
    %v162 = vld [vmem:[#allocation2 + $0x14] sm:$0xf]
    %v163 = vld [vmem:[#allocation2 + $0x18] sm:$0xf]
    %v164 = vld [vmem:[#allocation2 + $0x1c] sm:$0xf]
    %v165 = vld [vmem:[#allocation2 + $0x20] sm:$0xf]
    %v166 = vld [vmem:[#allocation2 + $0x24] sm:$0xf]
    %v167 = vld [vmem:[#allocation2 + $0x28] sm:$0xf]
    %v168 = vld [vmem:[#allocation2 + $0x2c] sm:$0xf]
    %v169 = vld [vmem:[#allocation2 + $0x30] sm:$0xf]
    %v170 = vld [vmem:[#allocation2 + $0x34] sm:$0xf]
    %v171 = vld [vmem:[#allocation2 + $0x38] sm:$0xf]
    %v172 = vld [vmem:[#allocation2 + $0x3c] sm:$0xf]
    %v173 = vld [vmem:[#allocation2 + $0x40] sm:$0xf]
    %v174 = vld [vmem:[#allocation2 + $0x44] sm:$0xf]
    %v175 = vld [vmem:[#allocation2 + $0x48] sm:$0xf]
    %v176 = vld [vmem:[#allocation2 + $0x4c] sm:$0xf]
    %v177 = vld [vmem:[#allocation2 + $0x50] sm:$0xf]
    %v178 = vld [vmem:[#allocation2 + $0x54] sm:$0xf]
    %v179 = vld [vmem:[#allocation2 + $0x58] sm:$0xf]
    %v180 = vld [vmem:[#allocation2 + $0x5c] sm:$0xf]
    %v181 = vld [vmem:[#allocation2 + $0x60] sm:$0xf]
    %v182 = vld [vmem:[#allocation2 + $0x64] sm:$0xf]
    %v183 = vld [vmem:[#allocation2 + $0x68] sm:$0xf]
    %v184 = vld [vmem:[#allocation2 + $0x6c] sm:$0xf]
    %v185 = vld [vmem:[#allocation2 + $0x70] sm:$0xf]
    %v186 = vld [vmem:[#allocation2 + $0x74] sm:$0xf]
    %v187 = vld [vmem:[#allocation2 + $0x78] sm:$0xf]
    %v188 = vld [vmem:[#allocation2 + $0x7c] sm:$0xf]
    %v189 = vld [vmem:[#allocation2 + $0x80] sm:$0xf]
    %v190 = vld [vmem:[#allocation2 + $0x84] sm:$0xf]
    %v191 = vld [vmem:[#allocation2 + $0x88] sm:$0xf]
    %v192 = vld [vmem:[#allocation2 + $0x8c] sm:$0xf]
    %v193 = vld [vmem:[#allocation2 + $0x90] sm:$0xf]
    %v194 = vld [vmem:[#allocation2 + $0x94] sm:$0xf]
    %v195 = vld [vmem:[#allocation2 + $0x98] sm:$0xf]
    %v196 = vld [vmem:[#allocation2 + $0x9c] sm:$0xf]
    %v197 = vld [vmem:[#allocation2 + $0xa0] sm:$0xf]
    %v198 = vld [vmem:[#allocation2 + $0xa4] sm:$0xf]
    %v199 = vld [vmem:[#allocation2 + $0xa8] sm:$0xf]
    %v200 = vld [vmem:[#allocation2 + $0xac] sm:$0xf]
    %v201 = vld [vmem:[#allocation2 + $0xb0] sm:$0xf]
    %v202 = vld [vmem:[#allocation2 + $0xb4] sm:$0xf]
    %v203 = vld [vmem:[#allocation2 + $0xb8] sm:$0xf]
    %v204 = vld [vmem:[#allocation2 + $0xbc] sm:$0xf]
    %v253 = vunpack.c.l.b16 %v157
    %v254 = vunpack.c.l.b16 %v158
    %v255 = vunpack.c.l.b16 %v159
    %v256 = vunpack.c.l.b16 %v160
    %v257 = vunpack.c.l.b16 %v161
    %v258 = vunpack.c.l.b16 %v162
    %v259 = vunpack.c.l.b16 %v163
    %v260 = vunpack.c.l.b16 %v164
    %v261 = vunpack.c.l.b16 %v165
    %v262 = vunpack.c.l.b16 %v166
    %v263 = vunpack.c.l.b16 %v167
    %v264 = vunpack.c.l.b16 %v168
    %v265 = vunpack.c.l.b16 %v169
    %v266 = vunpack.c.l.b16 %v170
    %v267 = vunpack.c.l.b16 %v171
    %v268 = vunpack.c.l.b16 %v172
    %v269 = vunpack.c.l.b16 %v173
    %v270 = vunpack.c.l.b16 %v174
    %v271 = vunpack.c.l.b16 %v175
    %v272 = vunpack.c.l.b16 %v176
    %v273 = vunpack.c.l.b16 %v177
    %v274 = vunpack.c.l.b16 %v178
    %v275 = vunpack.c.l.b16 %v179
    %v276 = vunpack.c.l.b16 %v180
    %v277 = vunpack.c.l.b16 %v181
    %v278 = vunpack.c.l.b16 %v182
    %v279 = vunpack.c.l.b16 %v183
    %v280 = vunpack.c.l.b16 %v184
    %v281 = vunpack.c.l.b16 %v185
    %v282 = vunpack.c.l.b16 %v186
    %v283 = vunpack.c.l.b16 %v187
    %v284 = vunpack.c.l.b16 %v188
    %v285 = vunpack.c.l.b16 %v189
    %v286 = vunpack.c.l.b16 %v190
    %v287 = vunpack.c.l.b16 %v191
    %v288 = vunpack.c.l.b16 %v192
    %v289 = vunpack.c.l.b16 %v193
    %v290 = vunpack.c.l.b16 %v194
    %v291 = vunpack.c.l.b16 %v195
    %v292 = vunpack.c.l.b16 %v196
    %v293 = vunpack.c.l.b16 %v197
    %v294 = vunpack.c.l.b16 %v198
    %v295 = vunpack.c.l.b16 %v199
    %v296 = vunpack.c.l.b16 %v200
    %v297 = vunpack.c.l.b16 %v201
    %v298 = vunpack.c.l.b16 %v202
    %v299 = vunpack.c.l.b16 %v203
    %v300 = vunpack.c.l.b16 %v204
    %v301 = vpack.c.b16 %v254, %v253
    %v302 = vpack.c.b16 %v256, %v255
    %v303 = vpack.c.b16 %v258, %v257
    %v304 = vpack.c.b16 %v260, %v259
    %v305 = vpack.c.b16 %v262, %v261
    %v306 = vpack.c.b16 %v264, %v263
    %v307 = vpack.c.b16 %v266, %v265
    %v308 = vpack.c.b16 %v268, %v267
    %v309 = vpack.c.b16 %v270, %v269
    %v310 = vpack.c.b16 %v272, %v271
    %v311 = vpack.c.b16 %v274, %v273
    %v312 = vpack.c.b16 %v276, %v275
    %v313 = vpack.c.b16 %v278, %v277
    %v314 = vpack.c.b16 %v280, %v279
    %v315 = vpack.c.b16 %v282, %v281
    %v316 = vpack.c.b16 %v284, %v283
    %v317 = vpack.c.b16 %v286, %v285
    %v318 = vpack.c.b16 %v288, %v287
    %v319 = vpack.c.b16 %v290, %v289
    %v320 = vpack.c.b16 %v292, %v291
    %v321 = vpack.c.b16 %v294, %v293
    %v322 = vpack.c.b16 %v296, %v295
    %v323 = vpack.c.b16 %v298, %v297
    %v324 = vpack.c.b16 %v300, %v299
    %349 = vmatprep.subr.bf16.mxu0 0
    %350 = vmatpush1.bf16.msra.mxu0 %v301
    %351 = vmatprep.subr.bf16.mxu0 0
    %352 = vmatpush1.bf16.msra.mxu0 %v302
    %353 = vmatprep.subr.bf16.mxu0 0
    %354 = vmatpush1.bf16.msra.mxu0 %v303
    %355 = vmatprep.subr.bf16.mxu0 0
    %356 = vmatpush1.bf16.msra.mxu0 %v304
    %357 = vmatprep.subr.bf16.mxu0 0
    %358 = vmatpush1.bf16.msra.mxu0 %v305
    %359 = vmatprep.subr.bf16.mxu0 0
    %360 = vmatpush1.bf16.msra.mxu0 %v306
    %361 = vmatprep.subr.bf16.mxu0 0
    %362 = vmatpush1.bf16.msra.mxu0 %v307
    %363 = vmatprep.subr.bf16.mxu0 0
    %364 = vmatpush1.bf16.msra.mxu0 %v308
    %365 = vmatprep.subr.bf16.mxu0 0
    %366 = vmatpush1.bf16.msra.mxu0 %v309
    %367 = vmatprep.subr.bf16.mxu0 0
    %368 = vmatpush1.bf16.msra.mxu0 %v310
    %369 = vmatprep.subr.bf16.mxu0 0
    %370 = vmatpush1.bf16.msra.mxu0 %v311
    %371 = vmatprep.subr.bf16.mxu0 0
    %372 = vmatpush1.bf16.msra.mxu0 %v312
    %373 = vmatprep.subr.bf16.mxu0 0
    %374 = vmatpush1.bf16.msra.mxu0 %v313
    %375 = vmatprep.subr.bf16.mxu0 0
    %376 = vmatpush1.bf16.msra.mxu0 %v314
    %377 = vmatprep.subr.bf16.mxu0 0
    %378 = vmatpush1.bf16.msra.mxu0 %v315
    %379 = vmatprep.subr.bf16.mxu0 0
    %380 = vmatpush1.bf16.msra.mxu0 %v316
    %381 = vmatprep.mubr.bf16.mxu0 %v155
    %382 = vmatmul.mubr.bf16.gmra.mrb[0].mxu0 %v154
    %v383 = vpop.f32.mrb[0].mxu0
    %v384 = vadd.f32 0.0, %v383
    %v385 = vpop.f32.mrb[0].mxu0
    %v386 = vpop.f32.mrb[0].mxu0
    %v387 = vpop.f32.mrb[0].mxu0
    %388 = vdwg.mxu0
    %389 = vmatprep.subr.bf16.mxu0 0
    %390 = vmatpush1.bf16.msra.mxu0 %v317
    %391 = vmatprep.subr.bf16.mxu0 0
    %392 = vmatpush1.bf16.msra.mxu0 %v318
    %393 = vmatprep.subr.bf16.mxu0 0
    %394 = vmatpush1.bf16.msra.mxu0 %v319
    %395 = vmatprep.subr.bf16.mxu0 0
    %396 = vmatpush1.bf16.msra.mxu0 %v320
    %397 = vmatprep.subr.bf16.mxu0 0
    %398 = vmatpush1.bf16.msra.mxu0 %v321
    %399 = vmatprep.subr.bf16.mxu0 0
    %400 = vmatpush1.bf16.msra.mxu0 %v322
    %401 = vmatprep.subr.bf16.mxu0 0
    %402 = vmatpush1.bf16.msra.mxu0 %v323
    %403 = vmatprep.subr.bf16.mxu0 0
    %404 = vmatpush1.bf16.msra.mxu0 %v324
    %405 = vmatprep.subr.bf16.mxu0 0
    %406 = vmatpush1.bf16.msra.mxu0 0
    %407 = vmatprep.subr.bf16.mxu0 0
    %408 = vmatpush1.bf16.msra.mxu0 0
    %409 = vmatprep.subr.bf16.mxu0 0
    %410 = vmatpush1.bf16.msra.mxu0 0
    %411 = vmatprep.subr.bf16.mxu0 0
    %412 = vmatpush1.bf16.msra.mxu0 0
    %413 = vmatprep.subr.bf16.mxu0 0
    %414 = vmatpush1.bf16.msra.mxu0 0
    %415 = vmatprep.subr.bf16.mxu0 0
    %416 = vmatpush1.bf16.msra.mxu0 0
    %417 = vmatprep.subr.bf16.mxu0 0
    %418 = vmatpush1.bf16.msra.mxu0 0
    %419 = vmatprep.subr.bf16.mxu0 0
    %420 = vmatpush1.bf16.msra.mxu0 0
    %421 = vmatprep.mubr.bf16.mxu0 0
    %422 = vmatmul.mubr.bf16.gmra.mrb[0].mxu0 %v156
    %v423 = vpop.f32.mrb[0].mxu0
    %v424 = vadd.f32 %v384, %v423
    %v425 = vpop.f32.mrb[0].mxu0
    %v426 = vpop.f32.mrb[0].mxu0
    %v427 = vpop.f32.mrb[0].mxu0
    %428 = vdwg.mxu0
    %v429 = vmax.f32 %v424, 0.0
    %v430 = vpack.c.bf16 %v429, %v429
    %v431 = vld [vmem:[%s2] sm:$0xf]
    %v432 = vld [vmem:[%s2 + $0x4] sm:$0xf]
    %v433 = vld [vmem:[%s2 + $0x8] sm:$0xf]
    %v434 = vld [vmem:[%s2 + $0xc] sm:$0xf]
    %v435 = vld [vmem:[%s2 + $0x10] sm:$0xf]
    %v436 = vld [vmem:[%s2 + $0x14] sm:$0xf]
    %v437 = vld [vmem:[%s2 + $0x18] sm:$0xf]
    %v438 = vld [vmem:[%s2 + $0x1c] sm:$0xf]
    %v439 = vld [vmem:[%s2 + $0x20] sm:$0xf]
    %v440 = vld [vmem:[%s2 + $0x24] sm:$0xf]
    %v441 = vld [vmem:[%s2 + $0x28] sm:$0xf]
    %v442 = vld [vmem:[%s2 + $0x2c] sm:$0xf]
    %v443 = vld [vmem:[%s2 + $0x30] sm:$0xf]
    %v444 = vld [vmem:[%s2 + $0x34] sm:$0xf]
    %v445 = vld [vmem:[%s2 + $0x38] sm:$0xf]
    %v446 = vld [vmem:[%s2 + $0x3c] sm:$0xf]
    %v447 = vld [vmem:[%s3] sm:$0x1]
    %v449 = vlaneseq
    %v450 = vshrl.u32 %v449, 7
    %v451 = vsub.s32 0, %v450
    %v452 = vrot.slane %v447, %v451
    %v470 = vunpack.c.l.b16 %v431
    %v471 = vunpack.c.l.b16 %v432
    %v472 = vunpack.c.l.b16 %v433
    %v473 = vunpack.c.l.b16 %v434
    %v474 = vunpack.c.l.b16 %v435
    %v475 = vunpack.c.l.b16 %v436
    %v476 = vunpack.c.l.b16 %v437
    %v477 = vunpack.c.l.b16 %v438
    %v478 = vunpack.c.l.b16 %v439
    %v479 = vunpack.c.l.b16 %v440
    %v480 = vunpack.c.l.b16 %v441
    %v481 = vunpack.c.l.b16 %v442
    %v482 = vunpack.c.l.b16 %v443
    %v483 = vunpack.c.l.b16 %v444
    %v484 = vunpack.c.l.b16 %v445
    %v485 = vunpack.c.l.b16 %v446
    %v486 = vpack.c.b16 %v471, %v470
    %v487 = vpack.c.b16 %v473, %v472
    %v488 = vpack.c.b16 %v475, %v474
    %v489 = vpack.c.b16 %v477, %v476
    %v490 = vpack.c.b16 %v479, %v478
    %v491 = vpack.c.b16 %v481, %v480
    %v492 = vpack.c.b16 %v483, %v482
    %v493 = vpack.c.b16 %v485, %v484
    %502 = vmatprep.subr.bf16.mxu0 0
    %503 = vmatpush1.bf16.msra.mxu0 %v486
    %504 = vmatprep.subr.bf16.mxu0 0
    %505 = vmatpush1.bf16.msra.mxu0 %v487
    %506 = vmatprep.subr.bf16.mxu0 0
    %507 = vmatpush1.bf16.msra.mxu0 %v488
    %508 = vmatprep.subr.bf16.mxu0 0
    %509 = vmatpush1.bf16.msra.mxu0 %v489
    %510 = vmatprep.subr.bf16.mxu0 0
    %511 = vmatpush1.bf16.msra.mxu0 %v490
    %512 = vmatprep.subr.bf16.mxu0 0
    %513 = vmatpush1.bf16.msra.mxu0 %v491
    %514 = vmatprep.subr.bf16.mxu0 0
    %515 = vmatpush1.bf16.msra.mxu0 %v492
    %516 = vmatprep.subr.bf16.mxu0 0
    %517 = vmatpush1.bf16.msra.mxu0 %v493
    %518 = vmatprep.subr.bf16.mxu0 0
    %519 = vmatpush1.bf16.msra.mxu0 0
    %520 = vmatprep.subr.bf16.mxu0 0
    %521 = vmatpush1.bf16.msra.mxu0 0
    %522 = vmatprep.subr.bf16.mxu0 0
    %523 = vmatpush1.bf16.msra.mxu0 0
    %524 = vmatprep.subr.bf16.mxu0 0
    %525 = vmatpush1.bf16.msra.mxu0 0
    %526 = vmatprep.subr.bf16.mxu0 0
    %527 = vmatpush1.bf16.msra.mxu0 0
    %528 = vmatprep.subr.bf16.mxu0 0
    %529 = vmatpush1.bf16.msra.mxu0 0
    %530 = vmatprep.subr.bf16.mxu0 0
    %531 = vmatpush1.bf16.msra.mxu0 0
    %532 = vmatprep.subr.bf16.mxu0 0
    %533 = vmatpush1.bf16.msra.mxu0 0
    %534 = vmatprep.mubr.bf16.mxu0 0
    %535 = vmatmul.mubr.bf16.gmra.mrb[0].mxu0 %v430
    %v536 = vpop.f32.mrb[0].mxu0
    %v537 = vadd.f32 %v452, %v536
    %v538 = vpop.f32.mrb[0].mxu0
    %v539 = vpop.f32.mrb[0].mxu0
    %v540 = vpop.f32.mrb[0].mxu0
    %541 = vdwg.mxu0
    %543 = vrot.lane.b32.xlu0 %v537, 96
    %v544 = vpop.permute.xlu0 %543
    %v546 = vmul.f32 %v537, %v544
    %vm547 = vcmask 261120
    %v548 = vsel %vm547, %v546, 0.0
    %549 = vadd.xlane.f32.xlu0 %v548
    %v550 = vpop.xlane.xlu0 %549
    %v551 = vsub.f32 0.0, %v550
    %v552 = vmul.f32 %v551, 1.442695
    %v553 = vpow.pop %v552
    %v554 = vadd.f32 %v553, 1.0
    %v555 = vrcp.pop %v554
    %vm556 = vcmask 7168
    %557 = vst.msk [vmem:[%s4] sm:$0xff] %vm556, %v555
    // Predicated region
    $region22: #{tpu_custom_call.1} parent=1 // pred_check
      _
    $region23: #{tpu_custom_call.1} parent=1 // pred_check_branch
      %559 = sbr.rel (0) target = $region25
    $region24: #{tpu_custom_call.1} parent=1 // pred_region
      _
    $region25: #{tpu_custom_call.1} parent=1 // pred_fallthru
      _
    // Predicated region
    $region26: #{tpu_custom_call.1} parent=1 // pred_check
      _
    $region27: #{tpu_custom_call.1} parent=1 // pred_check_branch
      %561 = sbr.rel (0) target = $region29
    $region28: #{tpu_custom_call.1} parent=1 // pred_region
      _
    $region29: #{tpu_custom_call.1} parent=1 // pred_fallthru
      _
    %562 = vsyncpa [#allocation3], 1

</llo_original>
